<compile_context>
chip_gen: v7x
topology: tpu7x:2x2x1
jax: 0.10.0
libtpu: 0.0.40
codegen_flags: <defaults>
</compile_context>

<pallas_src>
import functools

import numpy as np
import jax
import jax.numpy as jnp
from jax.experimental import pallas as pl
from jax.experimental.pallas import tpu as pltpu

EPS = 1e-5                 # BatchNorm1d default eps
LANE = 128                 # TPU lane width
SUBLANE = 8                # TPU sublane height
_WIDE_OUT_MAX_BATCH = 4096  # below this, keep the lane-dense (B,128) output


def _round_up(n, m):
    return ((n + m - 1) // m) * m


@functools.lru_cache(maxsize=None)
def _build_layout(in_f, h1, h2, h3):
    """Static row/col ranges of every parameter inside the packed slab.

    Every weight block starts on a multiple-of-8 row so no slice straddles an
    (8,128) sublane tile.
    """
    layout = {}
    row = 0
    for name, nrows, ncols in (("w1", in_f, h1), ("w2", h1, h2),
                               ("w3", h2, h3), ("w4", h3, LANE)):
        row = _round_up(row, SUBLANE)          # sublane-tile aligned start
        layout[name] = (row, row + nrows, 0, ncols)
        row += nrows
    row = _round_up(row, SUBLANE)              # 1-row params in their own tiles
    for name, ncols in (("b1", h1), ("b2", h2), ("b3", h3),
                        ("g1", h1), ("g2", h2), ("g3", h3),
                        ("be1", h1), ("be2", h2), ("be3", h3),
                        ("b4", LANE)):
        layout[name] = (row, row + 1, 0, ncols)
        row += 1
    return layout, _round_up(row, SUBLANE)


def _pack_slab_host(params, layout, rows):
    """Pack all parameters into one lane-dense (rows, 128) f32 slab.

    Done entirely on the host with numpy -> a single device transfer instead
    of ~14 per-call dynamic-update-slice ops.
    """
    slab = np.zeros((rows, LANE), np.float32)
    for name, (r0, r1, c0, _c1) in layout.items():
        val = np.asarray(params[name], np.float32).reshape(r1 - r0, -1)
        slab[r0:r1, c0:c0 + val.shape[1]] = val   # w4/b4 stay zero-padded to 128
    return jnp.asarray(slab)


@functools.lru_cache(maxsize=None)
def _get_kernel(bn_model, dims, batch, out_width):
    if bn_model not in (None, "pre", "post"):
        raise ValueError(f"unknown BN_model: {bn_model!r}")

    in_f, h1, h2, h3, _n_out = dims
    layout, _ = _build_layout(in_f, h1, h2, h3)
    inv_b = 1.0 / float(batch)

    def kernel(x_ref, slab_ref, o_ref):
        def sl(name):
            r0, r1, c0, c1 = layout[name]
            return slab_ref[r0:r1, c0:c1]          # static, tile-aligned slice

        # Hoist every (tiny) parameter load to the top of the kernel.
        x = x_ref[...]
        w1, b1 = sl("w1"), sl("b1")
        w2, b2 = sl("w2"), sl("b2")
        w3, b3 = sl("w3"), sl("b3")
        w4, b4 = sl("w4"), sl("b4")                # lane-padded to 128
        if bn_model is not None:
            g1, be1 = sl("g1"), sl("be1")
            g2, be2 = sl("g2"), sl("be2")
            g3, be3 = sl("g3"), sl("be3")

        def linear(a, w, b):
            # One MXU pass per layer (MXU slot is otherwise idle); removes the
            # lane broadcasts and serial VPU add chains of the unrolled form.
            return jnp.dot(a, w, preferred_element_type=jnp.float32) + b

        def batchnorm(z, g, be):
            # Training-mode BatchNorm1d: batch stats, biased variance, eps.
            # One-pass stats + folded affine; variance clamped at 0.
            s = jnp.sum(z, axis=0, keepdims=True)
            ss = jnp.sum(z * z, axis=0, keepdims=True)
            mu = s * inv_b
            var = jnp.maximum(ss * inv_b - mu * mu, 0.0)
            scale = g * jax.lax.rsqrt(var + EPS)
            shift = be - mu * scale
            return z * scale + shift

        def relu(t):
            return jnp.maximum(t, 0.0)

        if bn_model is None:
            p1 = relu(linear(x, w1, b1))
            p2 = relu(linear(p1, w2, b2))
            p3 = relu(linear(p2, w3, b3))
            out = linear(p3, w4, b4)
        elif bn_model == "pre":
            p1 = relu(batchnorm(linear(x, w1, b1), g1, be1))
            p2 = relu(batchnorm(linear(p1, w2, b2), g2, be2))
            p3 = relu(batchnorm(linear(p2, w3, b3), g3, be3))
            out = linear(p3, w4, b4)
        else:  # 'post'
            p1 = relu(linear(x, w1, b1))
            p2 = relu(linear(batchnorm(p1, g1, be1), w2, b2))
            p3 = relu(linear(batchnorm(p2, g2, be2), w3, b3))
            out = linear(batchnorm(p3, g3, be3), w4, b4)

        # Small B: lane-dense (B,128) unmasked store. Large B: true n_out.
        o_ref[...] = out[:, :out_width].astype(o_ref.dtype)

    return kernel


@functools.lru_cache(maxsize=None)
def _get_apply(bn_model, dims):
    in_f, h1, h2, h3, n_out = dims
    _, rows = _build_layout(in_f, h1, h2, h3)

    def apply(x, slab):
        batch = x.shape[0]
        out_width = LANE if batch <= _WIDE_OUT_MAX_BATCH else n_out
        kernel = _get_kernel(bn_model, dims, batch, out_width)

        # Whole-array VMEM residency (x padded to 128 lanes, output, slab),
        # with 2x headroom; keeps v5e's smaller scoped-VMEM default honest.
        vmem_bytes = 4 * (batch * LANE + batch * LANE + rows * LANE)
        vmem_limit = int(min(max(2 * vmem_bytes + (2 << 20), 16 << 20), 100 << 20))

        out = pl.pallas_call(
            kernel,
            out_shape=jax.ShapeDtypeStruct((batch, out_width), jnp.float32),
            in_specs=[pl.BlockSpec(memory_space=pltpu.MemorySpace.VMEM),
                      pl.BlockSpec(memory_space=pltpu.MemorySpace.VMEM)],
            out_specs=pl.BlockSpec(memory_space=pltpu.MemorySpace.VMEM),
            compiler_params=pltpu.CompilerParams(vmem_limit_bytes=vmem_limit),
        )(x.astype(jnp.float32), slab)
        return out[:, :n_out]                       # sliced inside jit

    return jax.jit(apply)


class NetClass3:
    """Packs params once (host-side) and exposes a jitted fused forward."""

    def __init__(self, params, bn_model=None):
        in_f, h1 = params["w1"].shape
        h2 = params["w2"].shape[1]
        h3 = params["w3"].shape[1]
        n_out = params["w4"].shape[1]
        assert n_out <= LANE
        self.dims = (int(in_f), int(h1), int(h2), int(h3), int(n_out))
        self.bn_model = bn_model
        layout, rows = _build_layout(*self.dims[:4])
        self.slab = _pack_slab_host(params, layout, rows)   # cached packed slab
        self._apply = _get_apply(bn_model, self.dims)

    def __call__(self, x):
        return self._apply(x, self.slab)


_NET_CACHE = {}


def net_class3_forward(x, params, bn_model=None):
    """Functional convenience wrapper; caches the packed net per params dict."""
    key = (id(params), bn_model)
    entry = _NET_CACHE.get(key)
    if entry is None or entry[0] is not params:
        entry = (params, NetClass3(params, bn_model=bn_model))
        _NET_CACHE[key] = entry
    return entry[1](x)


def init_params(key, in_features=2, n_hidden1=4, n_hidden2=4, n_hidden3=4,
                out_features=1):
    """Deterministic synthetic params (PyTorch-like uniform init ranges)."""
    ks = jax.random.split(key, 8)

    def lin(kw, kb, fan_in, fan_out):
        bound = 1.0 / jnp.sqrt(fan_in)
        w = jax.random.uniform(kw, (fan_in, fan_out), jnp.float32, -bound, bound)
        b = jax.random.uniform(kb, (1, fan_out), jnp.float32, -bound, bound)
        return w, b

    w1, b1 = lin(ks[0], ks[1], in_features, n_hidden1)
    w2, b2 = lin(ks[2], ks[3], n_hidden1, n_hidden2)
    w3, b3 = lin(ks[4], ks[5], n_hidden2, n_hidden3)
    w4, b4 = lin(ks[6], ks[7], n_hidden3, out_features)

    ones = lambda n: jnp.ones((1, n), jnp.float32)
    zeros = lambda n: jnp.zeros((1, n), jnp.float32)
    return dict(w1=w1, b1=b1, w2=w2, b2=b2, w3=w3, b3=b3, w4=w4, b4=b4,
                g1=ones(n_hidden1), be1=zeros(n_hidden1),
                g2=ones(n_hidden2), be2=zeros(n_hidden2),
                g3=ones(n_hidden3), be3=zeros(n_hidden3))


def _reference(x, p, bn_model):
    """Plain-JAX reference of net_class3.forward (for sanity check)."""
    relu = lambda t: jnp.maximum(t, 0.0)

    def bn(z, g, be):
        mu = z.mean(0, keepdims=True)
        var = z.var(0, keepdims=True)      # biased, matching training-mode BN
        return (z - mu) / jnp.sqrt(var + EPS) * g + be

    if bn_model is None:
        p1 = relu(x @ p["w1"] + p["b1"])
        p2 = relu(p1 @ p["w2"] + p["b2"])
        p3 = relu(p2 @ p["w3"] + p["b3"])
        return p3 @ p["w4"] + p["b4"]
    if bn_model == "pre":
        p1 = relu(bn(x @ p["w1"] + p["b1"], p["g1"], p["be1"]))
        p2 = relu(bn(p1 @ p["w2"] + p["b2"], p["g2"], p["be2"]))
        p3 = relu(bn(p2 @ p["w3"] + p["b3"], p["g3"], p["be3"]))
        return p3 @ p["w4"] + p["b4"]
    # 'post'
    p1 = relu(x @ p["w1"] + p["b1"])
    p2 = relu(bn(p1, p["g1"], p["be1"]) @ p["w2"] + p["b2"])
    p3 = relu(bn(p2, p["g2"], p["be2"]) @ p["w3"] + p["b3"])
    return bn(p3, p["g3"], p["be3"]) @ p["w4"] + p["b4"]


if __name__ == "__main__":
    key = jax.random.PRNGKey(0)
    kx, kp = jax.random.split(key)

    B, IN = 8, 2
    x = jax.random.normal(kx, (B, IN), jnp.float32)
    params = init_params(kp, in_features=IN, n_hidden1=4, n_hidden2=4,
                         n_hidden3=4, out_features=1)

    for bn_model in (None, "pre", "post"):
        net = NetClass3(params, bn_model=bn_model)   # slab packed once, cached
        out = jax.block_until_ready(net(x))
        out2 = jax.block_until_ready(net(x))         # cached jitted path, no retrace
        ref = _reference(x, params, bn_model)
        assert out.shape == (B, 1), out.shape
        assert jnp.allclose(out, ref, atol=1e-4, rtol=1e-4), \
            f"mismatch vs reference for BN_model={bn_model}"
        assert jnp.allclose(out, out2), f"non-deterministic repeat for {bn_model}"
        # functional wrapper path (exercises the module-level cache)
        out3 = jax.block_until_ready(net_class3_forward(x, params, bn_model=bn_model))
        assert jnp.allclose(out3, ref, atol=1e-4, rtol=1e-4)

    print("KERNEL_OK")
</pallas_src>

<mosaic_0001>
module attributes {stable_mosaic.version = 11 : i64} {
  func.func @kernel(%arg0: memref<8x2xf32, #tpu.memory_space<vmem>>, %arg1: memref<48x128xf32, #tpu.memory_space<vmem>>, %arg2: memref<8x128xf32, #tpu.memory_space<vmem>>) attributes {dimension_semantics = [], scalar_prefetch = 0 : i64, scratch_operands = 0 : i64, tpu.core_type = #tpu.core_type<tc>} {
    %c0 = arith.constant 0 : index
    %c0_0 = arith.constant 0 : index
    %0 = vector.load %arg0[%c0, %c0_0] : memref<8x2xf32, #tpu.memory_space<vmem>>, vector<8x2xf32>
    %c0_1 = arith.constant 0 : index
    %c0_2 = arith.constant 0 : index
    %1 = vector.load %arg1[%c0_1, %c0_2] : memref<48x128xf32, #tpu.memory_space<vmem>>, vector<2x4xf32>
    %c32 = arith.constant 32 : index
    %c0_3 = arith.constant 0 : index
    %2 = vector.load %arg1[%c32, %c0_3] : memref<48x128xf32, #tpu.memory_space<vmem>>, vector<1x4xf32>
    %c8 = arith.constant 8 : index
    %c0_4 = arith.constant 0 : index
    %3 = vector.load %arg1[%c8, %c0_4] : memref<48x128xf32, #tpu.memory_space<vmem>>, vector<4x4xf32>
    %c33 = arith.constant 33 : index
    %c0_5 = arith.constant 0 : index
    %4 = vector.load %arg1[%c33, %c0_5] : memref<48x128xf32, #tpu.memory_space<vmem>>, vector<1x4xf32>
    %c16 = arith.constant 16 : index
    %c0_6 = arith.constant 0 : index
    %5 = vector.load %arg1[%c16, %c0_6] : memref<48x128xf32, #tpu.memory_space<vmem>>, vector<4x4xf32>
    %c34 = arith.constant 34 : index
    %c0_7 = arith.constant 0 : index
    %6 = vector.load %arg1[%c34, %c0_7] : memref<48x128xf32, #tpu.memory_space<vmem>>, vector<1x4xf32>
    %c24 = arith.constant 24 : index
    %c0_8 = arith.constant 0 : index
    %7 = vector.load %arg1[%c24, %c0_8] : memref<48x128xf32, #tpu.memory_space<vmem>>, vector<4x128xf32>
    %c41 = arith.constant 41 : index
    %c0_9 = arith.constant 0 : index
    %8 = vector.load %arg1[%c41, %c0_9] : memref<48x128xf32, #tpu.memory_space<vmem>>, vector<1x128xf32>
    %cst = arith.constant dense<0.000000e+00> : vector<8x4xf32>
    %9 = tpu.matmul %0, %1, %cst {dimension_numbers = #tpu.dot_dimension_numbers<[1], [0], [0], [1], [0, 0, 1, 1], [], []>} : vector<8x2xf32>, vector<2x4xf32>, vector<8x4xf32> -> vector<8x4xf32>
    %10 = vector.broadcast %2 : vector<1x4xf32> to vector<8x4xf32>
    %11 = arith.addf %9, %10 : vector<8x4xf32>
    %cst_10 = arith.constant 0.000000e+00 : f32
    %12 = vector.broadcast %cst_10 : f32 to vector<8x4xf32>
    %13 = arith.maximumf %11, %12 : vector<8x4xf32>
    %cst_11 = arith.constant dense<0.000000e+00> : vector<8x4xf32>
    %14 = tpu.matmul %13, %3, %cst_11 {dimension_numbers = #tpu.dot_dimension_numbers<[1], [0], [0], [1], [0, 0, 1, 1], [], []>} : vector<8x4xf32>, vector<4x4xf32>, vector<8x4xf32> -> vector<8x4xf32>
    %15 = vector.broadcast %4 : vector<1x4xf32> to vector<8x4xf32>
    %16 = arith.addf %14, %15 : vector<8x4xf32>
    %cst_12 = arith.constant 0.000000e+00 : f32
    %17 = vector.broadcast %cst_12 : f32 to vector<8x4xf32>
    %18 = arith.maximumf %16, %17 : vector<8x4xf32>
    %cst_13 = arith.constant dense<0.000000e+00> : vector<8x4xf32>
    %19 = tpu.matmul %18, %5, %cst_13 {dimension_numbers = #tpu.dot_dimension_numbers<[1], [0], [0], [1], [0, 0, 1, 1], [], []>} : vector<8x4xf32>, vector<4x4xf32>, vector<8x4xf32> -> vector<8x4xf32>
    %20 = vector.broadcast %6 : vector<1x4xf32> to vector<8x4xf32>
    %21 = arith.addf %19, %20 : vector<8x4xf32>
    %cst_14 = arith.constant 0.000000e+00 : f32
    %22 = vector.broadcast %cst_14 : f32 to vector<8x4xf32>
    %23 = arith.maximumf %21, %22 : vector<8x4xf32>
    %cst_15 = arith.constant dense<0.000000e+00> : vector<8x128xf32>
    %24 = tpu.matmul %23, %7, %cst_15 {dimension_numbers = #tpu.dot_dimension_numbers<[1], [0], [0], [1], [0, 0, 1, 1], [], []>} : vector<8x4xf32>, vector<4x128xf32>, vector<8x128xf32> -> vector<8x128xf32>
    %25 = vector.broadcast %8 : vector<1x128xf32> to vector<8x128xf32>
    %26 = arith.addf %24, %25 : vector<8x128xf32>
    %c0_16 = arith.constant 0 : index
    %c0_17 = arith.constant 0 : index
    %27 = vector.load %arg2[%c0_16, %c0_17] : memref<8x128xf32, #tpu.memory_space<vmem>>, vector<8x128xf32>
    tpu.vector_store %arg2[%c0_16, %c0_17], %26 {strides = array<i32>} : memref<8x128xf32, #tpu.memory_space<vmem>>, vector<8x128xf32>,
    return
  }
}

</mosaic_0001>

<llo_original>
// kernel: apply.1
$region0: #{apply.1}
  #allocation0 [shape = 'u32[]', space=smem, size = 0x4, offset = 0x4, fixed_abs, tag = 'smem constant byte address 0x4 - core index']
  #allocation1 [shape = 'u32[144,128]{1,0:T(1,128)}', space=vmem, size = 0x12000, scoped, tag = 'internal scratch']
  %s0 = inlined_call_operand.vmem [shape: f32[8,2], index: 0, kind: input, shape index: {}]
  %s1 = inlined_call_operand.hbm [shape: f32[48,128], index: 1, kind: input, shape index: {}]
  %s2 = inlined_call_operand.vmem [shape: f32[8,128], index: 2, kind: output, shape index: {}]
  %s3 = sld [smem:[#allocation0]]
  $region22: #{apply.1} parent=0
    _
  %s5 = ssub.s32 1, %s3
  %s6 = scalar_select 0, %s5, %s3
  $region1: #{apply.1} parent=0
    #allocation2 [shape = 'u8[24576]{0}', space=vmem, size = 0x6000, scoped, tag = 'input window, operand 1, single buffered']
    #allocation3 [shape = 's32[1]{0}', space=sflag, size = 0x4, scoped, tag = 'scoped memory for apply.1']
    %7 = vsyncpa [#allocation3], 0
    // Predicated region
    $region2: #{apply.1} parent=1 // pred_check
      _
    $region3: #{apply.1} parent=1 // pred_check_branch
      %9 = sbr.rel (0) target = $region5
    $region4: #{apply.1} parent=1 // pred_region
      _
    $region5: #{apply.1} parent=1 // pred_fallthru
      _
    // Predicated region
    $region6: #{apply.1} parent=1 // pred_check
      _
    $region7: #{apply.1} parent=1 // pred_check_branch
      %11 = sbr.rel (0) target = $region9
    $region8: #{apply.1} parent=1 // pred_region
      %s13 = ssub.s32 768, 768
      %14 = vsyncadd [#allocation3], %s13
      %s15 = sshll.u32 [#allocation2], 4
      %s16 = int_to_ptr.vmem [resolvable:$true] %s15
      %21 = dma.hbm_to_vmem [thread:$0]  %s1, 768, %s16, [#allocation3], 128, 128, 8
    $region9: #{apply.1} parent=1 // pred_fallthru
      _
    // Predicated region
    $region10: #{apply.1} parent=1 // pred_check
      _
    $region11: #{apply.1} parent=1 // pred_check_branch
      %23 = sbr.rel (0) target = $region13
    $region12: #{apply.1} parent=1 // pred_region
      %24 = dma.done [#allocation3], 768
    $region13: #{apply.1} parent=1 // pred_fallthru
      _
    %v25 = vld [vmem:[%s0] sm:$0xff]
    %v26 = vld [vmem:[#allocation2] sm:$0x3]
    %v27 = vld [vmem:[#allocation2 + $0x20] sm:$0x1]
    %v28 = vld [vmem:[#allocation2 + $0x8] sm:$0xf]
    %v29 = vld [vmem:[#allocation2 + $0x21] sm:$0x1]
    %v30 = vld [vmem:[#allocation2 + $0x10] sm:$0xf]
    %v31 = vld [vmem:[#allocation2 + $0x22] sm:$0x1]
    %v32 = vld [vmem:[#allocation2 + $0x18] sm:$0xf]
    %v33 = vld [vmem:[#allocation2 + $0x29] sm:$0x1]
    %v34 = vlaneseq
    %v35 = vshrl.u32 %v34, 7
    %v36 = vsub.s32 0, %v35
    %v37 = vrot.slane %v27, %v36
    %vm38 = vcmask 15360
    %v40 = vsel %vm38, %v25, 0
    %vm42 = vcmask 1041408
    %v44 = vsel %vm42, %v26, 0
    %46 = vmatprep.subr.mxu0 0.0
    %47 = vmatpush1.msra.mxu0 %v44
    %48 = vmatprep.subr.mxu0 0.0
    %49 = vmatpush1.msra.mxu0 0.0
    %50 = vmatprep.subr.mxu0 0.0
    %51 = vmatpush1.msra.mxu0 0.0
    %52 = vmatprep.subr.mxu0 0.0
    %53 = vmatpush1.msra.mxu0 0.0
    %54 = vmatprep.subr.mxu0 0.0
    %55 = vmatpush1.msra.mxu0 0.0
    %56 = vmatprep.subr.mxu0 0.0
    %57 = vmatpush1.msra.mxu0 0.0
    %58 = vmatprep.subr.mxu0 0.0
    %59 = vmatpush1.msra.mxu0 0.0
    %60 = vmatprep.subr.mxu0 0.0
    %61 = vmatpush1.msra.mxu0 0.0
    %62 = vmatprep.subr.mxu0 0.0
    %63 = vmatpush1.msra.mxu0 0.0
    %64 = vmatprep.subr.mxu0 0.0
    %65 = vmatpush1.msra.mxu0 0.0
    %66 = vmatprep.subr.mxu0 0.0
    %67 = vmatpush1.msra.mxu0 0.0
    %68 = vmatprep.subr.mxu0 0.0
    %69 = vmatpush1.msra.mxu0 0.0
    %70 = vmatprep.subr.mxu0 0.0
    %71 = vmatpush1.msra.mxu0 0.0
    %72 = vmatprep.subr.mxu0 0.0
    %73 = vmatpush1.msra.mxu0 0.0
    %74 = vmatprep.subr.mxu0 0.0
    %75 = vmatpush1.msra.mxu0 0.0
    %76 = vmatprep.subr.mxu0 0.0
    %77 = vmatpush1.msra.mxu0 0.0
    %78 = vmatprep.subr.mxu0 0.0
    %79 = vmatpush1.msra.mxu0 0.0
    %80 = vmatprep.subr.mxu0 0.0
    %81 = vmatpush1.msra.mxu0 0.0
    %82 = vmatprep.subr.mxu0 0.0
    %83 = vmatpush1.msra.mxu0 0.0
    %84 = vmatprep.subr.mxu0 0.0
    %85 = vmatpush1.msra.mxu0 0.0
    %86 = vmatprep.subr.mxu0 0.0
    %87 = vmatpush1.msra.mxu0 0.0
    %88 = vmatprep.subr.mxu0 0.0
    %89 = vmatpush1.msra.mxu0 0.0
    %90 = vmatprep.subr.mxu0 0.0
    %91 = vmatpush1.msra.mxu0 0.0
    %92 = vmatprep.subr.mxu0 0.0
    %93 = vmatpush1.msra.mxu0 0.0
    %94 = vmatprep.subr.mxu0 0.0
    %95 = vmatpush1.msra.mxu0 0.0
    %96 = vmatprep.subr.mxu0 0.0
    %97 = vmatpush1.msra.mxu0 0.0
    %98 = vmatprep.subr.mxu0 0.0
    %99 = vmatpush1.msra.mxu0 0.0
    %100 = vmatprep.subr.mxu0 0.0
    %101 = vmatpush1.msra.mxu0 0.0
    %102 = vmatprep.subr.mxu0 0.0
    %103 = vmatpush1.msra.mxu0 0.0
    %104 = vmatprep.subr.mxu0 0.0
    %105 = vmatpush1.msra.mxu0 0.0
    %106 = vmatprep.subr.mxu0 0.0
    %107 = vmatpush1.msra.mxu0 0.0
    %108 = vmatprep.subr.mxu0 0.0
    %109 = vmatpush1.msra.mxu0 0.0
    %110 = vmatprep.mubr.f32.mxu0 0.0
    %111 = vmatmul.mubr.f32.gmra.mrb[0].mxu0 %v40
    %v112 = vpop.f32.mrb[0].mxu0
    %v113 = vadd.f32 %v37, %v112
    %v114 = vpop.f32.mrb[0].mxu0
    %115 = vdwg.mxu0
    %v116 = vmax.f32 %v113, 0.0
    %v117 = vlaneseq
    %v118 = vshrl.u32 %v117, 7
    %v119 = vsub.s32 0, %v118
    %v120 = vrot.slane %v29, %v119
    %vm121 = vcmask 31744
    %v123 = vsel %vm121, %v116, 0
    %vm125 = vcmask 1043456
    %v127 = vsel %vm125, %v28, 0
    %129 = vmatprep.subr.mxu0 0.0
    %130 = vmatpush1.msra.mxu0 %v127
    %131 = vmatprep.subr.mxu0 0.0
    %132 = vmatpush1.msra.mxu0 0.0
    %133 = vmatprep.subr.mxu0 0.0
    %134 = vmatpush1.msra.mxu0 0.0
    %135 = vmatprep.subr.mxu0 0.0
    %136 = vmatpush1.msra.mxu0 0.0
    %137 = vmatprep.subr.mxu0 0.0
    %138 = vmatpush1.msra.mxu0 0.0
    %139 = vmatprep.subr.mxu0 0.0
    %140 = vmatpush1.msra.mxu0 0.0
    %141 = vmatprep.subr.mxu0 0.0
    %142 = vmatpush1.msra.mxu0 0.0
    %143 = vmatprep.subr.mxu0 0.0
    %144 = vmatpush1.msra.mxu0 0.0
    %145 = vmatprep.subr.mxu0 0.0
    %146 = vmatpush1.msra.mxu0 0.0
    %147 = vmatprep.subr.mxu0 0.0
    %148 = vmatpush1.msra.mxu0 0.0
    %149 = vmatprep.subr.mxu0 0.0
    %150 = vmatpush1.msra.mxu0 0.0
    %151 = vmatprep.subr.mxu0 0.0
    %152 = vmatpush1.msra.mxu0 0.0
    %153 = vmatprep.subr.mxu0 0.0
    %154 = vmatpush1.msra.mxu0 0.0
    %155 = vmatprep.subr.mxu0 0.0
    %156 = vmatpush1.msra.mxu0 0.0
    %157 = vmatprep.subr.mxu0 0.0
    %158 = vmatpush1.msra.mxu0 0.0
    %159 = vmatprep.subr.mxu0 0.0
    %160 = vmatpush1.msra.mxu0 0.0
    %161 = vmatprep.subr.mxu0 0.0
    %162 = vmatpush1.msra.mxu0 0.0
    %163 = vmatprep.subr.mxu0 0.0
    %164 = vmatpush1.msra.mxu0 0.0
    %165 = vmatprep.subr.mxu0 0.0
    %166 = vmatpush1.msra.mxu0 0.0
    %167 = vmatprep.subr.mxu0 0.0
    %168 = vmatpush1.msra.mxu0 0.0
    %169 = vmatprep.subr.mxu0 0.0
    %170 = vmatpush1.msra.mxu0 0.0
    %171 = vmatprep.subr.mxu0 0.0
    %172 = vmatpush1.msra.mxu0 0.0
    %173 = vmatprep.subr.mxu0 0.0
    %174 = vmatpush1.msra.mxu0 0.0
    %175 = vmatprep.subr.mxu0 0.0
    %176 = vmatpush1.msra.mxu0 0.0
    %177 = vmatprep.subr.mxu0 0.0
    %178 = vmatpush1.msra.mxu0 0.0
    %179 = vmatprep.subr.mxu0 0.0
    %180 = vmatpush1.msra.mxu0 0.0
    %181 = vmatprep.subr.mxu0 0.0
    %182 = vmatpush1.msra.mxu0 0.0
    %183 = vmatprep.subr.mxu0 0.0
    %184 = vmatpush1.msra.mxu0 0.0
    %185 = vmatprep.subr.mxu0 0.0
    %186 = vmatpush1.msra.mxu0 0.0
    %187 = vmatprep.subr.mxu0 0.0
    %188 = vmatpush1.msra.mxu0 0.0
    %189 = vmatprep.subr.mxu0 0.0
    %190 = vmatpush1.msra.mxu0 0.0
    %191 = vmatprep.subr.mxu0 0.0
    %192 = vmatpush1.msra.mxu0 0.0
    %193 = vmatprep.mubr.f32.mxu0 0.0
    %194 = vmatmul.mubr.f32.gmra.mrb[0].mxu0 %v123
    %v195 = vpop.f32.mrb[0].mxu0
    %v196 = vadd.f32 %v120, %v195
    %v197 = vpop.f32.mrb[0].mxu0
    %198 = vdwg.mxu0
    %v199 = vmax.f32 %v196, 0.0
    %v200 = vlaneseq
    %v201 = vshrl.u32 %v200, 7
    %v202 = vsub.s32 0, %v201
    %v203 = vrot.slane %v31, %v202
    %v205 = vsel %vm121, %v199, 0
    %v208 = vsel %vm125, %v30, 0
    %210 = vmatprep.subr.mxu0 0.0
    %211 = vmatpush1.msra.mxu0 %v208
    %212 = vmatprep.subr.mxu0 0.0
    %213 = vmatpush1.msra.mxu0 0.0
    %214 = vmatprep.subr.mxu0 0.0
    %215 = vmatpush1.msra.mxu0 0.0
    %216 = vmatprep.subr.mxu0 0.0
    %217 = vmatpush1.msra.mxu0 0.0
    %218 = vmatprep.subr.mxu0 0.0
    %219 = vmatpush1.msra.mxu0 0.0
    %220 = vmatprep.subr.mxu0 0.0
    %221 = vmatpush1.msra.mxu0 0.0
    %222 = vmatprep.subr.mxu0 0.0
    %223 = vmatpush1.msra.mxu0 0.0
    %224 = vmatprep.subr.mxu0 0.0
    %225 = vmatpush1.msra.mxu0 0.0
    %226 = vmatprep.subr.mxu0 0.0
    %227 = vmatpush1.msra.mxu0 0.0
    %228 = vmatprep.subr.mxu0 0.0
    %229 = vmatpush1.msra.mxu0 0.0
    %230 = vmatprep.subr.mxu0 0.0
    %231 = vmatpush1.msra.mxu0 0.0
    %232 = vmatprep.subr.mxu0 0.0
    %233 = vmatpush1.msra.mxu0 0.0
    %234 = vmatprep.subr.mxu0 0.0
    %235 = vmatpush1.msra.mxu0 0.0
    %236 = vmatprep.subr.mxu0 0.0
    %237 = vmatpush1.msra.mxu0 0.0
    %238 = vmatprep.subr.mxu0 0.0
    %239 = vmatpush1.msra.mxu0 0.0
    %240 = vmatprep.subr.mxu0 0.0
    %241 = vmatpush1.msra.mxu0 0.0
    %242 = vmatprep.subr.mxu0 0.0
    %243 = vmatpush1.msra.mxu0 0.0
    %244 = vmatprep.subr.mxu0 0.0
    %245 = vmatpush1.msra.mxu0 0.0
    %246 = vmatprep.subr.mxu0 0.0
    %247 = vmatpush1.msra.mxu0 0.0
    %248 = vmatprep.subr.mxu0 0.0
    %249 = vmatpush1.msra.mxu0 0.0
    %250 = vmatprep.subr.mxu0 0.0
    %251 = vmatpush1.msra.mxu0 0.0
    %252 = vmatprep.subr.mxu0 0.0
    %253 = vmatpush1.msra.mxu0 0.0
    %254 = vmatprep.subr.mxu0 0.0
    %255 = vmatpush1.msra.mxu0 0.0
    %256 = vmatprep.subr.mxu0 0.0
    %257 = vmatpush1.msra.mxu0 0.0
    %258 = vmatprep.subr.mxu0 0.0
    %259 = vmatpush1.msra.mxu0 0.0
    %260 = vmatprep.subr.mxu0 0.0
    %261 = vmatpush1.msra.mxu0 0.0
    %262 = vmatprep.subr.mxu0 0.0
    %263 = vmatpush1.msra.mxu0 0.0
    %264 = vmatprep.subr.mxu0 0.0
    %265 = vmatpush1.msra.mxu0 0.0
    %266 = vmatprep.subr.mxu0 0.0
    %267 = vmatpush1.msra.mxu0 0.0
    %268 = vmatprep.subr.mxu0 0.0
    %269 = vmatpush1.msra.mxu0 0.0
    %270 = vmatprep.subr.mxu0 0.0
    %271 = vmatpush1.msra.mxu0 0.0
    %272 = vmatprep.subr.mxu0 0.0
    %273 = vmatpush1.msra.mxu0 0.0
    %274 = vmatprep.mubr.f32.mxu0 0.0
    %275 = vmatmul.mubr.f32.gmra.mrb[0].mxu0 %v205
    %v276 = vpop.f32.mrb[0].mxu0
    %v277 = vadd.f32 %v203, %v276
    %v278 = vpop.f32.mrb[0].mxu0
    %279 = vdwg.mxu0
    %v280 = vmax.f32 %v277, 0.0
    %v281 = vlaneseq
    %v282 = vshrl.u32 %v281, 7
    %v283 = vsub.s32 0, %v282
    %v284 = vrot.slane %v33, %v283
    %v286 = vsel %vm121, %v280, 0
    %v289 = vsel %vm125, %v32, 0
    %291 = vmatprep.subr.mxu0 0.0
    %292 = vmatpush1.msra.mxu0 %v289
    %293 = vmatprep.subr.mxu0 0.0
    %294 = vmatpush1.msra.mxu0 0.0
    %295 = vmatprep.subr.mxu0 0.0
    %296 = vmatpush1.msra.mxu0 0.0
    %297 = vmatprep.subr.mxu0 0.0
    %298 = vmatpush1.msra.mxu0 0.0
    %299 = vmatprep.subr.mxu0 0.0
    %300 = vmatpush1.msra.mxu0 0.0
    %301 = vmatprep.subr.mxu0 0.0
    %302 = vmatpush1.msra.mxu0 0.0
    %303 = vmatprep.subr.mxu0 0.0
    %304 = vmatpush1.msra.mxu0 0.0
    %305 = vmatprep.subr.mxu0 0.0
    %306 = vmatpush1.msra.mxu0 0.0
    %307 = vmatprep.subr.mxu0 0.0
    %308 = vmatpush1.msra.mxu0 0.0
    %309 = vmatprep.subr.mxu0 0.0
    %310 = vmatpush1.msra.mxu0 0.0
    %311 = vmatprep.subr.mxu0 0.0
    %312 = vmatpush1.msra.mxu0 0.0
    %313 = vmatprep.subr.mxu0 0.0
    %314 = vmatpush1.msra.mxu0 0.0
    %315 = vmatprep.subr.mxu0 0.0
    %316 = vmatpush1.msra.mxu0 0.0
    %317 = vmatprep.subr.mxu0 0.0
    %318 = vmatpush1.msra.mxu0 0.0
    %319 = vmatprep.subr.mxu0 0.0
    %320 = vmatpush1.msra.mxu0 0.0
    %321 = vmatprep.subr.mxu0 0.0
    %322 = vmatpush1.msra.mxu0 0.0
    %323 = vmatprep.subr.mxu0 0.0
    %324 = vmatpush1.msra.mxu0 0.0
    %325 = vmatprep.subr.mxu0 0.0
    %326 = vmatpush1.msra.mxu0 0.0
    %327 = vmatprep.subr.mxu0 0.0
    %328 = vmatpush1.msra.mxu0 0.0
    %329 = vmatprep.subr.mxu0 0.0
    %330 = vmatpush1.msra.mxu0 0.0
    %331 = vmatprep.subr.mxu0 0.0
    %332 = vmatpush1.msra.mxu0 0.0
    %333 = vmatprep.subr.mxu0 0.0
    %334 = vmatpush1.msra.mxu0 0.0
    %335 = vmatprep.subr.mxu0 0.0
    %336 = vmatpush1.msra.mxu0 0.0
    %337 = vmatprep.subr.mxu0 0.0
    %338 = vmatpush1.msra.mxu0 0.0
    %339 = vmatprep.subr.mxu0 0.0
    %340 = vmatpush1.msra.mxu0 0.0
    %341 = vmatprep.subr.mxu0 0.0
    %342 = vmatpush1.msra.mxu0 0.0
    %343 = vmatprep.subr.mxu0 0.0
    %344 = vmatpush1.msra.mxu0 0.0
    %345 = vmatprep.subr.mxu0 0.0
    %346 = vmatpush1.msra.mxu0 0.0
    %347 = vmatprep.subr.mxu0 0.0
    %348 = vmatpush1.msra.mxu0 0.0
    %349 = vmatprep.subr.mxu0 0.0
    %350 = vmatpush1.msra.mxu0 0.0
    %351 = vmatprep.subr.mxu0 0.0
    %352 = vmatpush1.msra.mxu0 0.0
    %353 = vmatprep.subr.mxu0 0.0
    %354 = vmatpush1.msra.mxu0 0.0
    %355 = vmatprep.mubr.f32.mxu0 0.0
    %356 = vmatmul.mubr.f32.gmra.mrb[0].mxu0 %v286
    %v357 = vpop.f32.mrb[0].mxu0
    %v358 = vadd.f32 %v284, %v357
    %v359 = vpop.f32.mrb[0].mxu0
    %360 = vdwg.mxu0
    %361 = vst [vmem:[%s2] sm:$0xff] %v358
    // Predicated region
    $region14: #{apply.1} parent=1 // pred_check
      _
    $region15: #{apply.1} parent=1 // pred_check_branch
      %363 = sbr.rel (0) target = $region17
    $region16: #{apply.1} parent=1 // pred_region
      _
    $region17: #{apply.1} parent=1 // pred_fallthru
      _
    // Predicated region
    $region18: #{apply.1} parent=1 // pred_check
      _
    $region19: #{apply.1} parent=1 // pred_check_branch
      %365 = sbr.rel (0) target = $region21
    $region20: #{apply.1} parent=1 // pred_region
      _
    $region21: #{apply.1} parent=1 // pred_fallthru
      _
    %366 = vsyncpa [#allocation3], 1

</llo_original>
